<compile_context>
chip_gen: v7x
topology: tpu7x:2x2x1
jax: 0.10.0
libtpu: 0.0.40
codegen_flags: <defaults>
</compile_context>

<pallas_src>
import functools

import jax
import jax.numpy as jnp
from jax.experimental import pallas as pl
from jax.experimental.pallas import tpu as pltpu

_LANE = 128     # lane width: 128-multiples give lane-dense activations/stores.
_TB_CAP = 1024  # batch-tile cap (sweepable 256/512/1024; working set stays tiny).


def _round_up(x, m):
    return ((x + m - 1) // m) * m


# ---------------------------------------------------------------------------
# Kernel: fused 3-layer MLP for one (net, batch-tile) grid point.
# ---------------------------------------------------------------------------
def _mu_net_kernel(net_idx_ref, obs_ref, w1_ref, b1_ref, w2_ref, b2_ref,
                   w3_ref, b3_ref, out_ref):
    del net_idx_ref  # consumed only by the BlockSpec index_maps.
    wdt = w1_ref.dtype  # f32 or bf16 (MXU operands); accumulation stays f32.

    x = obs_ref[...].astype(wdt)
    h1 = jnp.dot(x, w1_ref[...], preferred_element_type=jnp.float32)
    h1 = jnp.maximum(h1 + b1_ref[...], 0.0)

    h2 = jnp.dot(h1.astype(wdt), w2_ref[...], preferred_element_type=jnp.float32)
    h2 = jnp.maximum(h2 + b2_ref[...], 0.0)

    h3 = jnp.dot(h2.astype(wdt), w3_ref[...], preferred_element_type=jnp.float32)
    out_ref[...] = jnp.tanh(h3 + b3_ref[...]).astype(out_ref.dtype)


# ---------------------------------------------------------------------------
# pallas_call wrapper.  grid = (n_eval_nets, n_batch_tiles), both parallel.
# The prefetched net-index array selects which stored parameter set each net
# grid step uses, so mu / target / both are served without host-side slicing.
# ---------------------------------------------------------------------------
def _stacked_mlp_call(obs_p, net_indices, stacked_params, tb, real_dims):
    w1, b1, w2, b2, w3, b3 = stacked_params
    n_eval = net_indices.shape[0]
    b_pad, d = obs_p.shape
    h_p = w1.shape[2]
    a_p = w3.shape[2]
    grid = (n_eval, b_pad // tb)

    batch, obs_dim, act_dim = real_dims
    # Advisory cost from real dims (h_p stands in for hidden; hidden padding
    # is the only remaining slight over-statement).
    cost = pl.CostEstimate(
        flops=int(2 * n_eval * batch * (obs_dim * h_p + h_p * h_p + h_p * act_dim)),
        transcendentals=int(n_eval * batch * act_dim),
        bytes_accessed=int(obs_p.size * obs_p.dtype.itemsize
                           + n_eval * b_pad * a_p * 4
                           + sum(int(p.size) * p.dtype.itemsize
                                 for p in stacked_params)),
    )

    return pl.pallas_call(
        _mu_net_kernel,
        out_shape=jax.ShapeDtypeStruct((n_eval, b_pad, a_p), jnp.float32),
        grid_spec=pltpu.PrefetchScalarGridSpec(
            num_scalar_prefetch=1,
            grid=grid,
            in_specs=[
                # obs: tiled over batch, shared across nets; last dim kept at
                # its natural (full-array) size -> no feature-dim padding.
                pl.BlockSpec((tb, d), lambda n, b, net_idx: (b, 0)),
                # weights/biases: prefetched net index picks the parameter set
                # on the squeezed leading axis; constant block index along the
                # batch axis keeps them VMEM-resident across batch tiles.
                pl.BlockSpec((None, d, h_p), lambda n, b, net_idx: (net_idx[n], 0, 0)),
                pl.BlockSpec((None, 1, h_p), lambda n, b, net_idx: (net_idx[n], 0, 0)),
                pl.BlockSpec((None, h_p, h_p), lambda n, b, net_idx: (net_idx[n], 0, 0)),
                pl.BlockSpec((None, 1, h_p), lambda n, b, net_idx: (net_idx[n], 0, 0)),
                pl.BlockSpec((None, h_p, a_p), lambda n, b, net_idx: (net_idx[n], 0, 0)),
                pl.BlockSpec((None, 1, a_p), lambda n, b, net_idx: (net_idx[n], 0, 0)),
            ],
            out_specs=pl.BlockSpec((None, tb, a_p),
                                   lambda n, b, net_idx: (n, b, 0)),
        ),
        compiler_params=pltpu.CompilerParams(
            dimension_semantics=("parallel", "parallel")),
        cost_estimate=cost,
    )(net_indices, obs_p, w1, b1, w2, b2, w3, b3)


@functools.partial(jax.jit, static_argnames=("act_dim",))
def _forward_impl(obs, net_indices, stacked_params, *, act_dim):
    """Pick a batch tiling, run the fused kernel, slice off padding."""
    batch, obs_dim = obs.shape
    n_eval = net_indices.shape[0]

    # Batch tiling: tiles up to 1024 rows amortize the ~0.35 us/step grid
    # overhead.  For small batches (<= cap) the tile equals the batch, so no
    # wrapper-side padding / extra HBM roundtrip happens at all (important for
    # the per-env-step acting path, batch ~= 1).  Single-net calls with
    # batch >= 16 are split into two tiles so a v7x megacore can use both TCs.
    if batch <= _TB_CAP:
        if n_eval == 1 and batch >= 16:
            tb = _round_up(-(-batch // 2), 8)
        else:
            tb = batch
    else:
        tb = _TB_CAP
    b_pad = _round_up(batch, tb)

    obs_p = obs.astype(jnp.float32)
    if b_pad != batch:
        obs_p = jnp.pad(obs_p, ((0, b_pad - batch), (0, 0)))

    out_p = _stacked_mlp_call(obs_p, net_indices, stacked_params, tb,
                              (batch, obs_dim, act_dim))
    return out_p[:, :batch, :act_dim]


# ---------------------------------------------------------------------------
# Parameter handling.
# ---------------------------------------------------------------------------
def init_mu_net_params(key, obs_dim, hidden, act_dim):
    """Deterministic synthetic init (PyTorch-Linear-like uniform fan-in)."""
    keys = jax.random.split(key, 6)

    def linear(kw, kb, fan_in, fan_out):
        bound = 1.0 / jnp.sqrt(fan_in)
        w = jax.random.uniform(kw, (fan_in, fan_out), jnp.float32, -bound, bound)
        b = jax.random.uniform(kb, (1, fan_out), jnp.float32, -bound, bound)
        return w, b

    w1, b1 = linear(keys[0], keys[1], obs_dim, hidden)
    w2, b2 = linear(keys[2], keys[3], hidden, hidden)
    w3, b3 = linear(keys[4], keys[5], hidden, act_dim)
    return (w1, b1, w2, b2, w3, b3)


def pad_and_stack_params(param_sets, dtype=jnp.float32):
    """Zero-pad hidden/act feature dims to lane multiples of 128, cast weights
    to `dtype` (use jnp.bfloat16 on v6e/v7x for MXU-native passes + halved
    DMA; biases always stay f32 since bias-add/ReLU/tanh run in f32), and
    stack the nets on a leading axis (0 = mu_net, 1 = target_mu_net).  The obs
    feature dim (w1's contraction dim) is kept at its natural size so the
    wrapper never pads obs feature lanes.  One-time cost; zero padding is
    mathematically exact (padded lanes stay zero through ReLU/tanh)."""
    obs_dim, hidden = param_sets[0][0].shape
    act_dim = param_sets[0][4].shape[1]
    h_p = _round_up(hidden, _LANE)
    a_p = _round_up(act_dim, _LANE)

    def pad2(a, rows, cols, dt):
        return jnp.pad(a, ((0, rows - a.shape[0]),
                           (0, cols - a.shape[1]))).astype(dt)

    def pad_one(ps):
        w1, b1, w2, b2, w3, b3 = ps
        return (pad2(w1, obs_dim, h_p, dtype), pad2(b1, 1, h_p, jnp.float32),
                pad2(w2, h_p, h_p, dtype),     pad2(b2, 1, h_p, jnp.float32),
                pad2(w3, h_p, a_p, dtype),     pad2(b3, 1, a_p, jnp.float32))

    padded = [pad_one(ps) for ps in param_sets]
    return tuple(jnp.stack(tensors) for tensors in zip(*padded))


# ---------------------------------------------------------------------------
# DDPG.forward mirrors.
# ---------------------------------------------------------------------------
def ddpg_forward_both(obs, stacked_params, act_dim):
    """Evaluate mu_net AND target_mu_net in one fused pallas_call."""
    net_idx = jnp.arange(stacked_params[0].shape[0], dtype=jnp.int32)
    out = _forward_impl(obs, net_idx, stacked_params, act_dim=act_dim)
    return out[0], out[1]


def ddpg_forward(obs, stacked_params, act_dim, target=False):
    """Mirror of DDPG.forward(obs, target=False).  mu / target share one
    compiled executable: the net choice travels as prefetched SMEM data."""
    net_idx = jnp.array([1 if target else 0], dtype=jnp.int32)
    return _forward_impl(obs, net_idx, stacked_params, act_dim=act_dim)[0]


# TODO(synk): exploration noise / Adam update / target soft-update (tau mix)
# are training-time host logic, not part of the forward hot path.


if __name__ == "__main__":
    key = jax.random.PRNGKey(0)
    k_obs, k_net = jax.random.split(key)

    batch, obs_dim, hidden, act_dim = 8, 16, 32, 8

    obs = jax.random.normal(k_obs, (batch, obs_dim), jnp.float32)

    mu_params = init_mu_net_params(k_net, obs_dim, hidden, act_dim)
    # target_mu_net = deepcopy(mu_net): identical parameter copies at init.
    target_mu_params = tuple(jnp.array(p) for p in mu_params)

    # One-time: pad + stack both nets (index 0 = mu, index 1 = target).
    stacked = pad_and_stack_params([mu_params, target_mu_params],
                                   dtype=jnp.float32)

    # Fused mu + target evaluation in a single pallas_call.
    acs, acs_target = ddpg_forward_both(obs, stacked, act_dim)
    jax.block_until_ready((acs, acs_target))

    # Single-net paths (DDPG.forward semantics): mu and target reuse the same
    # compiled executable, only the prefetched net index differs.
    acs_single = ddpg_forward(obs, stacked, act_dim, target=False)
    acs_target_single = ddpg_forward(obs, stacked, act_dim, target=True)
    jax.block_until_ready((acs_single, acs_target_single))

    # Pure-JAX reference check (same math as mu_net).
    w1, b1, w2, b2, w3, b3 = mu_params
    ref = jnp.tanh(
        jnp.maximum(jnp.maximum(obs @ w1 + b1, 0.0) @ w2 + b2, 0.0) @ w3 + b3)
    assert acs.shape == (batch, act_dim)
    assert jnp.allclose(acs, ref, atol=1e-5), "mu mismatch vs reference"
    assert jnp.allclose(acs_target, ref, atol=1e-5), "target mismatch vs reference"
    assert jnp.allclose(acs_single, acs, atol=1e-6), "single-net mu mismatch"
    assert jnp.allclose(acs_target_single, acs_target, atol=1e-6), \
        "single-net target mismatch"

    # bf16-weight path (v6e/v7x MXU-native operands, f32 accumulation):
    # looser tolerance vs the f32 reference, per review.
    stacked_bf16 = pad_and_stack_params([mu_params, target_mu_params],
                                        dtype=jnp.bfloat16)
    acs_bf16, acs_target_bf16 = ddpg_forward_both(obs, stacked_bf16, act_dim)
    jax.block_until_ready((acs_bf16, acs_target_bf16))
    assert jnp.allclose(acs_bf16, ref, atol=1e-1), "bf16 mu mismatch vs reference"
    assert jnp.allclose(acs_target_bf16, ref, atol=1e-1), \
        "bf16 target mismatch vs reference"

    print("KERNEL_OK")
</pallas_src>

<mosaic_0001>
module attributes {stable_mosaic.version = 11 : i64} {
  func.func @_mu_net_kernel(%arg0: i32, %arg1: i32, %arg2: memref<2xi32, #tpu.memory_space<smem>>, %arg3: memref<8x16xf32, #tpu.memory_space<vmem>>, %arg4: memref<1x16x128xf32, #tpu.memory_space<vmem>>, %arg5: memref<1x1x128xf32, #tpu.memory_space<vmem>>, %arg6: memref<1x128x128xf32, #tpu.memory_space<vmem>>, %arg7: memref<1x1x128xf32, #tpu.memory_space<vmem>>, %arg8: memref<1x128x128xf32, #tpu.memory_space<vmem>>, %arg9: memref<1x1x128xf32, #tpu.memory_space<vmem>>, %arg10: memref<1x8x128xf32, #tpu.memory_space<vmem>>) attributes {dimension_semantics = [#tpu.dimension_semantics<parallel>, #tpu.dimension_semantics<parallel>], iteration_bounds = array<i64: 2, 1>, scalar_prefetch = 1 : i64, scratch_operands = 0 : i64, tpu.core_type = #tpu.core_type<tc>, window_params = [{transform_indices = @transform_0, window_bounds = array<i64: 8, 16>}, {transform_indices = @transform_1, window_bounds = array<i64: 1, 16, 128>}, {transform_indices = @transform_2, window_bounds = array<i64: 1, 1, 128>}, {transform_indices = @transform_3, window_bounds = array<i64: 1, 128, 128>}, {transform_indices = @transform_4, window_bounds = array<i64: 1, 1, 128>}, {transform_indices = @transform_5, window_bounds = array<i64: 1, 128, 128>}, {transform_indices = @transform_6, window_bounds = array<i64: 1, 1, 128>}, {transform_indices = @transform_7, window_bounds = array<i64: 1, 8, 128>}]} {
    %c0 = arith.constant 0 : index
    %c0_0 = arith.constant 0 : index
    %0 = vector.load %arg3[%c0, %c0_0] : memref<8x16xf32, #tpu.memory_space<vmem>>, vector<8x16xf32>
    %c0_1 = arith.constant 0 : index
    %c0_2 = arith.constant 0 : index
    %c0_3 = arith.constant 0 : index
    %1 = vector.load %arg4[%c0_1, %c0_2, %c0_3] : memref<1x16x128xf32, #tpu.memory_space<vmem>>, vector<1x16x128xf32>
    %2 = vector.shape_cast %1 : vector<1x16x128xf32> to vector<16x128xf32>
    %cst = arith.constant dense<0.000000e+00> : vector<8x128xf32>
    %3 = tpu.matmul %0, %2, %cst {dimension_numbers = #tpu.dot_dimension_numbers<[1], [0], [0], [1], [0, 0, 1, 1], [], []>} : vector<8x16xf32>, vector<16x128xf32>, vector<8x128xf32> -> vector<8x128xf32>
    %c0_4 = arith.constant 0 : index
    %c0_5 = arith.constant 0 : index
    %c0_6 = arith.constant 0 : index
    %4 = vector.load %arg5[%c0_4, %c0_5, %c0_6] : memref<1x1x128xf32, #tpu.memory_space<vmem>>, vector<1x1x128xf32>
    %5 = vector.shape_cast %4 : vector<1x1x128xf32> to vector<1x128xf32>
    %6 = vector.broadcast %5 : vector<1x128xf32> to vector<8x128xf32>
    %7 = arith.addf %3, %6 : vector<8x128xf32>
    %cst_7 = arith.constant 0.000000e+00 : f32
    %8 = vector.broadcast %cst_7 : f32 to vector<8x128xf32>
    %9 = arith.maximumf %7, %8 : vector<8x128xf32>
    %c0_8 = arith.constant 0 : index
    %c0_9 = arith.constant 0 : index
    %c0_10 = arith.constant 0 : index
    %10 = vector.load %arg6[%c0_8, %c0_9, %c0_10] : memref<1x128x128xf32, #tpu.memory_space<vmem>>, vector<1x128x128xf32>
    %11 = vector.shape_cast %10 : vector<1x128x128xf32> to vector<128x128xf32>
    %cst_11 = arith.constant dense<0.000000e+00> : vector<8x128xf32>
    %12 = tpu.matmul %9, %11, %cst_11 {dimension_numbers = #tpu.dot_dimension_numbers<[1], [0], [0], [1], [0, 0, 1, 1], [], []>} : vector<8x128xf32>, vector<128x128xf32>, vector<8x128xf32> -> vector<8x128xf32>
    %c0_12 = arith.constant 0 : index
    %c0_13 = arith.constant 0 : index
    %c0_14 = arith.constant 0 : index
    %13 = vector.load %arg7[%c0_12, %c0_13, %c0_14] : memref<1x1x128xf32, #tpu.memory_space<vmem>>, vector<1x1x128xf32>
    %14 = vector.shape_cast %13 : vector<1x1x128xf32> to vector<1x128xf32>
    %15 = vector.broadcast %14 : vector<1x128xf32> to vector<8x128xf32>
    %16 = arith.addf %12, %15 : vector<8x128xf32>
    %cst_15 = arith.constant 0.000000e+00 : f32
    %17 = vector.broadcast %cst_15 : f32 to vector<8x128xf32>
    %18 = arith.maximumf %16, %17 : vector<8x128xf32>
    %c0_16 = arith.constant 0 : index
    %c0_17 = arith.constant 0 : index
    %c0_18 = arith.constant 0 : index
    %19 = vector.load %arg8[%c0_16, %c0_17, %c0_18] : memref<1x128x128xf32, #tpu.memory_space<vmem>>, vector<1x128x128xf32>
    %20 = vector.shape_cast %19 : vector<1x128x128xf32> to vector<128x128xf32>
    %cst_19 = arith.constant dense<0.000000e+00> : vector<8x128xf32>
    %21 = tpu.matmul %18, %20, %cst_19 {dimension_numbers = #tpu.dot_dimension_numbers<[1], [0], [0], [1], [0, 0, 1, 1], [], []>} : vector<8x128xf32>, vector<128x128xf32>, vector<8x128xf32> -> vector<8x128xf32>
    %c0_20 = arith.constant 0 : index
    %c0_21 = arith.constant 0 : index
    %c0_22 = arith.constant 0 : index
    %22 = vector.load %arg9[%c0_20, %c0_21, %c0_22] : memref<1x1x128xf32, #tpu.memory_space<vmem>>, vector<1x1x128xf32>
    %23 = vector.shape_cast %22 : vector<1x1x128xf32> to vector<1x128xf32>
    %24 = vector.broadcast %23 : vector<1x128xf32> to vector<8x128xf32>
    %25 = arith.addf %21, %24 : vector<8x128xf32>
    %26 = math.tanh %25 : vector<8x128xf32>
    %c0_23 = arith.constant 0 : index
    %c0_24 = arith.constant 0 : index
    %c0_25 = arith.constant 0 : index
    %27 = vector.load %arg10[%c0_23, %c0_24, %c0_25] : memref<1x8x128xf32, #tpu.memory_space<vmem>>, vector<1x8x128xf32>
    %28 = vector.shape_cast %27 : vector<1x8x128xf32> to vector<8x128xf32>
    %29 = vector.shape_cast %26 : vector<8x128xf32> to vector<1x8x128xf32>
    tpu.vector_store %arg10[%c0_23, %c0_24, %c0_25], %29 {strides = array<i32>} : memref<1x8x128xf32, #tpu.memory_space<vmem>>, vector<1x8x128xf32>,
    return
  }
  func.func @transform_0(%arg0: i32, %arg1: i32, %arg2: memref<2xi32, #tpu.memory_space<smem>>) -> (i32, i32) {
    %c0_i32 = arith.constant 0 : i32
    %c0_i32_0 = arith.constant 0 : i32
    return %arg1, %c0_i32 : i32, i32
  }
  func.func @transform_1(%arg0: i32, %arg1: i32, %arg2: memref<2xi32, #tpu.memory_space<smem>>) -> (i32, i32, i32) {
    %0 = arith.index_cast %arg0 : i32 to index
    %1 = memref.load %arg2[%0] : memref<2xi32, #tpu.memory_space<smem>>
    %c0_i32 = arith.constant 0 : i32
    %c0_i32_0 = arith.constant 0 : i32
    %c0_i32_1 = arith.constant 0 : i32
    return %1, %c0_i32, %c0_i32_0 : i32, i32, i32
  }
  func.func @transform_2(%arg0: i32, %arg1: i32, %arg2: memref<2xi32, #tpu.memory_space<smem>>) -> (i32, i32, i32) {
    %0 = arith.index_cast %arg0 : i32 to index
    %1 = memref.load %arg2[%0] : memref<2xi32, #tpu.memory_space<smem>>
    %c0_i32 = arith.constant 0 : i32
    %c0_i32_0 = arith.constant 0 : i32
    %c0_i32_1 = arith.constant 0 : i32
    return %1, %c0_i32, %c0_i32_0 : i32, i32, i32
  }
  func.func @transform_3(%arg0: i32, %arg1: i32, %arg2: memref<2xi32, #tpu.memory_space<smem>>) -> (i32, i32, i32) {
    %0 = arith.index_cast %arg0 : i32 to index
    %1 = memref.load %arg2[%0] : memref<2xi32, #tpu.memory_space<smem>>
    %c0_i32 = arith.constant 0 : i32
    %c0_i32_0 = arith.constant 0 : i32
    %c0_i32_1 = arith.constant 0 : i32
    return %1, %c0_i32, %c0_i32_0 : i32, i32, i32
  }
  func.func @transform_4(%arg0: i32, %arg1: i32, %arg2: memref<2xi32, #tpu.memory_space<smem>>) -> (i32, i32, i32) {
    %0 = arith.index_cast %arg0 : i32 to index
    %1 = memref.load %arg2[%0] : memref<2xi32, #tpu.memory_space<smem>>
    %c0_i32 = arith.constant 0 : i32
    %c0_i32_0 = arith.constant 0 : i32
    %c0_i32_1 = arith.constant 0 : i32
    return %1, %c0_i32, %c0_i32_0 : i32, i32, i32
  }
  func.func @transform_5(%arg0: i32, %arg1: i32, %arg2: memref<2xi32, #tpu.memory_space<smem>>) -> (i32, i32, i32) {
    %0 = arith.index_cast %arg0 : i32 to index
    %1 = memref.load %arg2[%0] : memref<2xi32, #tpu.memory_space<smem>>
    %c0_i32 = arith.constant 0 : i32
    %c0_i32_0 = arith.constant 0 : i32
    %c0_i32_1 = arith.constant 0 : i32
    return %1, %c0_i32, %c0_i32_0 : i32, i32, i32
  }
  func.func @transform_6(%arg0: i32, %arg1: i32, %arg2: memref<2xi32, #tpu.memory_space<smem>>) -> (i32, i32, i32) {
    %0 = arith.index_cast %arg0 : i32 to index
    %1 = memref.load %arg2[%0] : memref<2xi32, #tpu.memory_space<smem>>
    %c0_i32 = arith.constant 0 : i32
    %c0_i32_0 = arith.constant 0 : i32
    %c0_i32_1 = arith.constant 0 : i32
    return %1, %c0_i32, %c0_i32_0 : i32, i32, i32
  }
  func.func @transform_7(%arg0: i32, %arg1: i32, %arg2: memref<2xi32, #tpu.memory_space<smem>>) -> (i32, i32, i32) {
    %c0_i32 = arith.constant 0 : i32
    %c0_i32_0 = arith.constant 0 : i32
    return %arg0, %arg1, %c0_i32 : i32, i32, i32
  }
}

</mosaic_0001>

<llo_original>
// kernel: _forward_impl.1
$region0: #{_forward_impl.1}
  #allocation0 [shape = 'u32[]', space=smem, size = 0x4, offset = 0x4, fixed_abs, tag = 'smem constant byte address 0x4 - core index']
  #allocation1 [shape = 'u32[144,128]{1,0:T(1,128)}', space=vmem, size = 0x12000, scoped, tag = 'internal scratch']
  #allocation2 [shape = 's32[1]{0}', space=sflag, size = 0x4, scoped, tag = 'scoped memory for _forward_impl.1']
  #allocation3 [shape = 'u8[512]{0}', space=smem, size = 0x200, scoped, tag = 'prefetched SMEM operand 0']
  %s0 = inlined_call_operand.vmem [shape: s32[2], index: 0, kind: input, shape index: {}]
  %s1 = inlined_call_operand.hbm [shape: f32[8,16], index: 1, kind: input, shape index: {}]
  %s2 = inlined_call_operand.hbm [shape: f32[2,16,128], index: 2, kind: input, shape index: {}]
  %s3 = inlined_call_operand.vmem [shape: f32[2,1,128], index: 3, kind: input, shape index: {}]
  %s4 = inlined_call_operand.hbm [shape: f32[2,128,128], index: 4, kind: input, shape index: {}]
  %s5 = inlined_call_operand.vmem [shape: f32[2,1,128], index: 5, kind: input, shape index: {}]
  %s6 = inlined_call_operand.hbm [shape: f32[2,128,128], index: 6, kind: input, shape index: {}]
  %s7 = inlined_call_operand.vmem [shape: f32[2,1,128], index: 7, kind: input, shape index: {}]
  %s8 = inlined_call_operand.hbm [shape: f32[2,8,128], index: 8, kind: output, shape index: {}]
  %s9 = sld [smem:[#allocation0]]
  $region77: #{_forward_impl.1} parent=0
    _
  %s11 = ssub.s32 1, %s9
  %s12 = scalar_select 0, %s11, %s9
  %s13 = sshll.u32 %s0, 4
  %s14 = int_to_ptr.vmem [resolvable:$true] %s13
  %16 = dma.vmem_to_smem %s14, 16, [#allocation3], [#allocation2]
  %17 = dma.done [#allocation2], 16
  %18 = sfence
  $region1: #{_forward_impl.1} parent=0
    #allocation4 [shape = 'u8[4096]{0}', space=vmem, size = 0x1000, scoped, tag = 'input window, operand 1, single buffered']
    #allocation5 [shape = 's32[2]{0}', space=sflag, size = 0x8, scoped, tag = 'scoped memory for _forward_impl.1']
    #allocation6 [shape = 's32[2]{0}', space=sflag, size = 0x8, scoped, tag = 'scoped memory for _forward_impl.1']
    #allocation7 [shape = 'u8[16384]{0}', space=vmem, size = 0x4000, scoped, tag = 'input window, operand 2']
    #allocation8 [shape = 's32[2]{0}', space=sflag, size = 0x8, scoped, tag = 'scoped memory for _forward_impl.1']
    #allocation9 [shape = 'u8[131072]{0}', space=vmem, size = 0x20000, scoped, tag = 'input window, operand 4']
    #allocation10 [shape = 'u8[131072]{0}', space=vmem, size = 0x20000, scoped, tag = 'input window, operand 6']
    #allocation11 [shape = 's32[2]{0}', space=sflag, size = 0x8, scoped, tag = 'scoped memory for _forward_impl.1']
    #allocation12 [shape = 'u8[8192]{0}', space=vmem, size = 0x2000, scoped, tag = 'output window, operand 0']
    %19 = vsyncpa [#allocation5], 0
    %20 = vsyncpa [#allocation8], 0
    %s21 = scalar_lea.sflag [#allocation8], 1
    %22 = vsyncpa %s21, 0
    %23 = vsyncpa [#allocation11], 0
    %s24 = scalar_lea.sflag [#allocation11], 1
    %25 = vsyncpa %s24, 0
    %26 = vsyncpa [#allocation6], 0
    %s27 = scalar_lea.sflag [#allocation6], 1
    %28 = vsyncpa %s27, 0
    loop: start=0, step=1, limit=4
    $region2: #{_forward_impl.1} parent=1 // loop_pre_header
      _
    $region3: #{_forward_impl.1} parent=1 // loop_header
      %s30 = sphi 0, %s34
      %p31 = scmp.ge.s32.totalorder %s30, 4
      %s37 = sphi 0, %s49
      %s38 = sphi 0, %s45
      %s39 = sphi 0, %s37
      %s40 = sphi 0, %s38
      %s41 = sphi 0, %s39
      %s42 = sphi 0, %s40
      %s52 = sphi 0, %s54
      %s55 = sphi 0, %s52
      %s56 = sphi 0, %s55
      %s72 = sphi 0, %s56
      %s80 = sphi 0, %s82
      %s83 = sphi 0, %s80
      %s84 = sphi 0, %s83
      %s100 = sphi 0, %s84
      %s108 = sphi 0, %s110
      %s111 = sphi 0, %s108
      %s112 = sphi 0, %s111
      %s128 = sphi 0, %s112
      %s136 = sphi 0, %s138
      %s139 = sphi 0, %s136
      %s140 = sphi 0, %s139
      %s156 = sphi 0, %s140
      %s164 = sphi 0, %s166
      %s167 = sphi 0, %s164
      %s168 = sphi 0, %s167
      %s184 = sphi 0, %s168
      %s192 = sphi 0, %s194
      %s195 = sphi 0, %s192
      %s196 = sphi 0, %s195
      %s212 = sphi 0, %s196
      %s220 = sphi 0, %s222
      %s223 = sphi 0, %s220
      %s224 = sphi 0, %s223
      %s240 = sphi 0, %s224
      %s248 = sphi 0, %s250
      %s251 = sphi 0, %s248
      %s252 = sphi 0, %s251
      %s268 = sphi 0, %s252
    $region4: #{_forward_impl.1} parent=1 // loop_header_branch
      %33 = sbr.rel (%p31) target = $region8
    $region5: #{_forward_impl.1} parent=1 // loop_body
      %s35 = ssub.s32 %s30, 1
      %s36 = ssub.s32 %s30, 2
      %s43 = sadd.s32 1, %s38
      %p44 = scmp.ge.s32.totalorder %s43, 1
      %s45 = scalar_select %p44, 0, %s43
      %s46 = sadd.s32 1, %s37
      %s47 = scalar_select %p44, %s46, %s37
      %p48 = scmp.ge.s32.totalorder %s47, 2
      %s49 = scalar_select %p48, 0, %s47
      %s50 = ssub.s32 %s38, %s45
      %p51 = scmp.eq.s32.totalorder %s50, 0
      %s53 = sadd.s32 %s52, 1
      %s54 = scalar_select %p51, %s52, %s53
      %p57 = pneg %p51
      %p58 = scmp.eq.s32.totalorder %s30, 1
      %p59 = por %p57, %p58
      %p60 = scmp.ne.s32.totalorder %s52, %s55
      %p61 = scmp.eq.s32.totalorder %s30, 0
      %p62 = por %p60, %p61
      %p63 = scmp.ne.s32.totalorder %s52, %s55
      %p64 = scmp.eq.s32.totalorder %s35, 1
      %p65 = por %p63, %p64
      %p66 = scmp.ne.s32.totalorder %s55, %s56
      %p67 = scmp.eq.s32.totalorder %s35, 0
      %p68 = por %p66, %p67
      %p69 = scmp.ne.s32.totalorder %s55, %s56
      %p70 = scmp.eq.s32.totalorder %s36, 1
      %p71 = por %p69, %p70
      %p73 = scmp.ne.s32.totalorder %s56, %s72
      %p74 = scmp.eq.s32.totalorder %s36, 0
      %p75 = por %p73, %p74
      %s76 = sld [smem:[#allocation3 + %s37]]
      %s77 = sld [smem:[#allocation3 + %s49]]
      %s78 = ssub.s32 %s76, %s77
      %p79 = scmp.eq.s32.totalorder %s78, 0
      %s81 = sadd.s32 %s80, 1
      %s82 = scalar_select %p79, %s80, %s81
      %p85 = pneg %p79
      %p86 = scmp.eq.s32.totalorder %s30, 1
      %p87 = por %p85, %p86
      %p88 = scmp.ne.s32.totalorder %s80, %s83
      %p89 = scmp.eq.s32.totalorder %s30, 0
      %p90 = por %p88, %p89
      %p91 = scmp.ne.s32.totalorder %s80, %s83
      %p92 = scmp.eq.s32.totalorder %s35, 1
      %p93 = por %p91, %p92
      %p94 = scmp.ne.s32.totalorder %s83, %s84
      %p95 = scmp.eq.s32.totalorder %s35, 0
      %p96 = por %p94, %p95
      %p97 = scmp.ne.s32.totalorder %s83, %s84
      %p98 = scmp.eq.s32.totalorder %s36, 1
      %p99 = por %p97, %p98
      %p101 = scmp.ne.s32.totalorder %s84, %s100
      %p102 = scmp.eq.s32.totalorder %s36, 0
      %p103 = por %p101, %p102
      %s104 = sld [smem:[#allocation3 + %s37]]
      %s105 = sld [smem:[#allocation3 + %s49]]
      %s106 = ssub.s32 %s104, %s105
      %p107 = scmp.eq.s32.totalorder %s106, 0
      %s109 = sadd.s32 %s108, 1
      %s110 = scalar_select %p107, %s108, %s109
      %p113 = pneg %p107
      %p114 = scmp.eq.s32.totalorder %s30, 1
      %p115 = por %p113, %p114
      %p116 = scmp.ne.s32.totalorder %s108, %s111
      %p117 = scmp.eq.s32.totalorder %s30, 0
      %p118 = por %p116, %p117
      %p119 = scmp.ne.s32.totalorder %s108, %s111
      %p120 = scmp.eq.s32.totalorder %s35, 1
      %p121 = por %p119, %p120
      %p122 = scmp.ne.s32.totalorder %s111, %s112
      %p123 = scmp.eq.s32.totalorder %s35, 0
      %p124 = por %p122, %p123
      %p125 = scmp.ne.s32.totalorder %s111, %s112
      %p126 = scmp.eq.s32.totalorder %s36, 1
      %p127 = por %p125, %p126
      %p129 = scmp.ne.s32.totalorder %s112, %s128
      %p130 = scmp.eq.s32.totalorder %s36, 0
      %p131 = por %p129, %p130
      %s132 = sld [smem:[#allocation3 + %s37]]
      %s133 = sld [smem:[#allocation3 + %s49]]
      %s134 = ssub.s32 %s132, %s133
      %p135 = scmp.eq.s32.totalorder %s134, 0
      %s137 = sadd.s32 %s136, 1
      %s138 = scalar_select %p135, %s136, %s137
      %p141 = pneg %p135
      %p142 = scmp.eq.s32.totalorder %s30, 1
      %p143 = por %p141, %p142
      %p144 = scmp.ne.s32.totalorder %s136, %s139
      %p145 = scmp.eq.s32.totalorder %s30, 0
      %p146 = por %p144, %p145
      %p147 = scmp.ne.s32.totalorder %s136, %s139
      %p148 = scmp.eq.s32.totalorder %s35, 1
      %p149 = por %p147, %p148
      %p150 = scmp.ne.s32.totalorder %s139, %s140
      %p151 = scmp.eq.s32.totalorder %s35, 0
      %p152 = por %p150, %p151
      %p153 = scmp.ne.s32.totalorder %s139, %s140
      %p154 = scmp.eq.s32.totalorder %s36, 1
      %p155 = por %p153, %p154
      %p157 = scmp.ne.s32.totalorder %s140, %s156
      %p158 = scmp.eq.s32.totalorder %s36, 0
      %p159 = por %p157, %p158
      %s160 = sld [smem:[#allocation3 + %s37]]
      %s161 = sld [smem:[#allocation3 + %s49]]
      %s162 = ssub.s32 %s160, %s161
      %p163 = scmp.eq.s32.totalorder %s162, 0
      %s165 = sadd.s32 %s164, 1
      %s166 = scalar_select %p163, %s164, %s165
      %p169 = pneg %p163
      %p170 = scmp.eq.s32.totalorder %s30, 1
      %p171 = por %p169, %p170
      %p172 = scmp.ne.s32.totalorder %s164, %s167
      %p173 = scmp.eq.s32.totalorder %s30, 0
      %p174 = por %p172, %p173
      %p175 = scmp.ne.s32.totalorder %s164, %s167
      %p176 = scmp.eq.s32.totalorder %s35, 1
      %p177 = por %p175, %p176
      %p178 = scmp.ne.s32.totalorder %s167, %s168
      %p179 = scmp.eq.s32.totalorder %s35, 0
      %p180 = por %p178, %p179
      %p181 = scmp.ne.s32.totalorder %s167, %s168
      %p182 = scmp.eq.s32.totalorder %s36, 1
      %p183 = por %p181, %p182
      %p185 = scmp.ne.s32.totalorder %s168, %s184
      %p186 = scmp.eq.s32.totalorder %s36, 0
      %p187 = por %p185, %p186
      %s188 = sld [smem:[#allocation3 + %s37]]
      %s189 = sld [smem:[#allocation3 + %s49]]
      %s190 = ssub.s32 %s188, %s189
      %p191 = scmp.eq.s32.totalorder %s190, 0
      %s193 = sadd.s32 %s192, 1
      %s194 = scalar_select %p191, %s192, %s193
      %p197 = pneg %p191
      %p198 = scmp.eq.s32.totalorder %s30, 1
      %p199 = por %p197, %p198
      %p200 = scmp.ne.s32.totalorder %s192, %s195
      %p201 = scmp.eq.s32.totalorder %s30, 0
      %p202 = por %p200, %p201
      %p203 = scmp.ne.s32.totalorder %s192, %s195
      %p204 = scmp.eq.s32.totalorder %s35, 1
      %p205 = por %p203, %p204
      %p206 = scmp.ne.s32.totalorder %s195, %s196
      %p207 = scmp.eq.s32.totalorder %s35, 0
      %p208 = por %p206, %p207
      %p209 = scmp.ne.s32.totalorder %s195, %s196
      %p210 = scmp.eq.s32.totalorder %s36, 1
      %p211 = por %p209, %p210
      %p213 = scmp.ne.s32.totalorder %s196, %s212
      %p214 = scmp.eq.s32.totalorder %s36, 0
      %p215 = por %p213, %p214
      %s216 = sld [smem:[#allocation3 + %s37]]
      %s217 = sld [smem:[#allocation3 + %s49]]
      %s218 = ssub.s32 %s216, %s217
      %p219 = scmp.eq.s32.totalorder %s218, 0
      %s221 = sadd.s32 %s220, 1
      %s222 = scalar_select %p219, %s220, %s221
      %p225 = pneg %p219
      %p226 = scmp.eq.s32.totalorder %s30, 1
      %p227 = por %p225, %p226
      %p228 = scmp.ne.s32.totalorder %s220, %s223
      %p229 = scmp.eq.s32.totalorder %s30, 0
      %p230 = por %p228, %p229
      %p231 = scmp.ne.s32.totalorder %s220, %s223
      %p232 = scmp.eq.s32.totalorder %s35, 1
      %p233 = por %p231, %p232
      %p234 = scmp.ne.s32.totalorder %s223, %s224
      %p235 = scmp.eq.s32.totalorder %s35, 0
      %p236 = por %p234, %p235
      %p237 = scmp.ne.s32.totalorder %s223, %s224
      %p238 = scmp.eq.s32.totalorder %s36, 1
      %p239 = por %p237, %p238
      %p241 = scmp.ne.s32.totalorder %s224, %s240
      %p242 = scmp.eq.s32.totalorder %s36, 0
      %p243 = por %p241, %p242
      %s244 = ssub.s32 %s37, %s49
      %s245 = ssub.s32 %s38, %s45
      %s246 = sor.u32 %s244, %s245
      %p247 = scmp.eq.s32.totalorder %s246, 0
      %s249 = sadd.s32 %s248, 1
      %s250 = scalar_select %p247, %s248, %s249
      %p253 = pneg %p247
      %p254 = scmp.eq.s32.totalorder %s30, 1
      %p255 = por %p253, %p254
      %p256 = scmp.ne.s32.totalorder %s248, %s251
      %p257 = scmp.eq.s32.totalorder %s30, 0
      %p258 = por %p256, %p257
      %p259 = scmp.ne.s32.totalorder %s248, %s251
      %p260 = scmp.eq.s32.totalorder %s35, 1
      %p261 = por %p259, %p260
      %p262 = scmp.ne.s32.totalorder %s251, %s252
      %p263 = scmp.eq.s32.totalorder %s35, 0
      %p264 = por %p262, %p263
      %p265 = scmp.ne.s32.totalorder %s251, %s252
      %p266 = scmp.eq.s32.totalorder %s36, 1
      %p267 = por %p265, %p266
      %p269 = scmp.ne.s32.totalorder %s252, %s268
      %p270 = scmp.eq.s32.totalorder %s36, 0
      %p271 = por %p269, %p270
      %p272 = scmp.le.s32.totalorder 1, %s30
      %p273 = scmp.lt.s32.totalorder %s30, 3
      %p274 = pnand %p272, %p273
      %p275 = pneg %p274
      // Predicated region
      $region9: #{_forward_impl.1} parent=5 // pred_check
        _
      $region10: #{_forward_impl.1} parent=5 // pred_check_branch
        %277 = sbr.rel (%p274) target = $region12
      $region11: #{_forward_impl.1} parent=5 // pred_region
        %s278 = ssub.s32 %s30, 1
        // Predicated region
        $region13: #{_forward_impl.1} parent=11 // pred_check
          %p279 = pneg %p68
        $region14: #{_forward_impl.1} parent=11 // pred_check_branch
          %281 = sbr.rel (%p279) target = $region16
        $region15: #{_forward_impl.1} parent=11 // pred_region
          %s283 = ssub.s32 128, 128
          %284 = vsyncadd [#allocation5], %s283
          %s285 = smul.addr %s40, 128
          %s286 = scalar_lea.hbm %s1, %s285
          %s288 = sshll.u32 [#allocation4], 4
          %s289 = int_to_ptr.vmem [resolvable:$true] %s288
          %291 = dma.hbm_to_vmem [thread:$0]  %s286, 128, %s289, [#allocation5]
        $region16: #{_forward_impl.1} parent=11 // pred_fallthru
          _
      $region12: #{_forward_impl.1} parent=5 // pred_fallthru
        _
      %p292 = scmp.lt.s32.totalorder %s30, 2
      // Predicated region
      $region17: #{_forward_impl.1} parent=5 // pred_check
        %p293 = pneg %p292
      $region18: #{_forward_impl.1} parent=5 // pred_check_branch
        %295 = sbr.rel (%p293) target = $region20
      $region19: #{_forward_impl.1} parent=5 // pred_region
        // Predicated region
        $region21: #{_forward_impl.1} parent=19 // pred_check
          %p296 = pneg %p90
        $region22: #{_forward_impl.1} parent=19 // pred_check_branch
          %298 = sbr.rel (%p296) target = $region24
        $region23: #{_forward_impl.1} parent=19 // pred_region
          %s299 = sand.u32 %s30, 1
          %s300 = scalar_lea.sflag [#allocation8], %s299
          %s301 = sand.u32 %s80, 1
          %s302 = smul.addr %s301, 16
          %s303 = scalar_lea.vmem [#allocation7], %s302
          %s304 = sld [smem:[#allocation3 + %s37]]
          %s306 = ssub.s32 256, 256
          %307 = vsyncadd %s300, %s306
          %s308 = smul.addr %s304, 2
          %s309 = smul.addr %s308, 128
          %s310 = scalar_lea.hbm %s2, %s309
          %s311 = sshll.u32 %s303, 4
          %s312 = int_to_ptr.vmem [resolvable:$true] %s311
          %317 = dma.hbm_to_vmem [thread:$0]  %s310, 256, %s312, %s300, 128, 128, 8
        $region24: #{_forward_impl.1} parent=19 // pred_fallthru
          _
        // Predicated region
        $region25: #{_forward_impl.1} parent=19 // pred_check
          %p318 = pneg %p118
        $region26: #{_forward_impl.1} parent=19 // pred_check_branch
          %320 = sbr.rel (%p318) target = $region28
        $region27: #{_forward_impl.1} parent=19 // pred_region
          %s321 = sld [smem:[#allocation3 + %s37]]
          %p322 = scmp.lt.s32.totalorder %s321, 1
          %s323 = scalar_select %p322, %s321, 1
          %s324 = scalar_lea.vmem %s3, %s323
          %s325 = sld [smem:[#allocation3 + %s37]]
        $region28: #{_forward_impl.1} parent=19 // pred_fallthru
          _
        // Predicated region
        $region29: #{_forward_impl.1} parent=19 // pred_check
          %p326 = pneg %p146
        $region30: #{_forward_impl.1} parent=19 // pred_check_branch
          %328 = sbr.rel (%p326) target = $region32
        $region31: #{_forward_impl.1} parent=19 // pred_region
          %s329 = sand.u32 %s30, 1
          %s330 = scalar_lea.sflag [#allocation8], %s329
          %s331 = sand.u32 %s136, 1
          %s332 = smul.addr %s331, 128
          %s333 = scalar_lea.vmem [#allocation9], %s332
          %s334 = sld [smem:[#allocation3 + %s37]]
          %s336 = ssub.s32 2048, 2048
          %337 = vsyncadd %s330, %s336
          %s338 = smul.addr %s334, 16
          %s339 = smul.addr %s338, 128
          %s340 = scalar_lea.hbm %s4, %s339
          %s341 = sshll.u32 %s333, 4
          %s342 = int_to_ptr.vmem [resolvable:$true] %s341
          %347 = dma.hbm_to_vmem [thread:$0]  %s340, 2048, %s342, %s330, 128, 128, 8
        $region32: #{_forward_impl.1} parent=19 // pred_fallthru
          _
        // Predicated region
        $region33: #{_forward_impl.1} parent=19 // pred_check
          %p348 = pneg %p174
        $region34: #{_forward_impl.1} parent=19 // pred_check_branch
          %350 = sbr.rel (%p348) target = $region36
        $region35: #{_forward_impl.1} parent=19 // pred_region
          %s351 = sld [smem:[#allocation3 + %s37]]
          %p352 = scmp.lt.s32.totalorder %s351, 1
          %s353 = scalar_select %p352, %s351, 1
          %s354 = scalar_lea.vmem %s5, %s353
          %s355 = sld [smem:[#allocation3 + %s37]]
        $region36: #{_forward_impl.1} parent=19 // pred_fallthru
          _
        // Predicated region
        $region37: #{_forward_impl.1} parent=19 // pred_check
          %p356 = pneg %p202
        $region38: #{_forward_impl.1} parent=19 // pred_check_branch
          %358 = sbr.rel (%p356) target = $region40
        $region39: #{_forward_impl.1} parent=19 // pred_region
          %s359 = sand.u32 %s192, 1
          %s360 = scalar_lea.sflag [#allocation11], %s359
          %s361 = sand.u32 %s192, 1
          %s362 = smul.addr %s361, 128
          %s363 = scalar_lea.vmem [#allocation10], %s362
          %s364 = sld [smem:[#allocation3 + %s37]]
          %s366 = ssub.s32 2048, 2048
          %367 = vsyncadd %s360, %s366
          %s368 = smul.addr %s364, 16
          %s369 = smul.addr %s368, 128
          %s370 = scalar_lea.hbm %s6, %s369
          %s371 = sshll.u32 %s363, 4
          %s372 = int_to_ptr.vmem [resolvable:$true] %s371
          %377 = dma.hbm_to_vmem [thread:$0]  %s370, 2048, %s372, %s360, 128, 128, 8
        $region40: #{_forward_impl.1} parent=19 // pred_fallthru
          _
        // Predicated region
        $region41: #{_forward_impl.1} parent=19 // pred_check
          %p378 = pneg %p230
        $region42: #{_forward_impl.1} parent=19 // pred_check_branch
          %380 = sbr.rel (%p378) target = $region44
        $region43: #{_forward_impl.1} parent=19 // pred_region
          %s381 = sld [smem:[#allocation3 + %s37]]
          %p382 = scmp.lt.s32.totalorder %s381, 1
          %s383 = scalar_select %p382, %s381, 1
          %s384 = scalar_lea.vmem %s7, %s383
          %s385 = sld [smem:[#allocation3 + %s37]]
        $region44: #{_forward_impl.1} parent=19 // pred_fallthru
          _
      $region20: #{_forward_impl.1} parent=5 // pred_fallthru
        _
      %p386 = scmp.le.s32.totalorder 1, %s30
      %p387 = scmp.lt.s32.totalorder %s30, 3
      %p388 = pnand %p386, %p387
      %p389 = pneg %p388
      // Predicated region
      $region45: #{_forward_impl.1} parent=5 // pred_check
        _
      $region46: #{_forward_impl.1} parent=5 // pred_check_branch
        %391 = sbr.rel (%p388) target = $region48
      $region47: #{_forward_impl.1} parent=5 // pred_region
        %s392 = ssub.s32 %s30, 1
        // Predicated region
        $region49: #{_forward_impl.1} parent=47 // pred_check
          %p393 = pneg %p68
        $region50: #{_forward_impl.1} parent=47 // pred_check_branch
          %395 = sbr.rel (%p393) target = $region52
        $region51: #{_forward_impl.1} parent=47 // pred_region
          %396 = dma.done [#allocation5], 128
        $region52: #{_forward_impl.1} parent=47 // pred_fallthru
          _
        %s397 = sand.u32 %s35, 1
        %s398 = scalar_lea.sflag [#allocation8], %s397
        %s399 = sand.u32 %s83, 1
        %s400 = smul.addr %s399, 16
        %s401 = scalar_lea.vmem [#allocation7], %s400
        // Predicated region
        $region53: #{_forward_impl.1} parent=47 // pred_check
          %p402 = pneg %p96
        $region54: #{_forward_impl.1} parent=47 // pred_check_branch
          %404 = sbr.rel (%p402) target = $region56
        $region55: #{_forward_impl.1} parent=47 // pred_region
          %405 = dma.done %s398, 256
        $region56: #{_forward_impl.1} parent=47 // pred_fallthru
          _
        %s406 = sand.u32 %s35, 1
        %s407 = scalar_lea.sflag [#allocation8], %s406
        %s408 = sand.u32 %s139, 1
        %s409 = smul.addr %s408, 128
        %s410 = scalar_lea.vmem [#allocation9], %s409
        // Predicated region
        $region57: #{_forward_impl.1} parent=47 // pred_check
          %p411 = pneg %p152
        $region58: #{_forward_impl.1} parent=47 // pred_check_branch
          %413 = sbr.rel (%p411) target = $region60
        $region59: #{_forward_impl.1} parent=47 // pred_region
          %414 = dma.done %s407, 2048
        $region60: #{_forward_impl.1} parent=47 // pred_fallthru
          _
        %s415 = sand.u32 %s195, 1
        %s416 = scalar_lea.sflag [#allocation11], %s415
        %s417 = sand.u32 %s195, 1
        %s418 = smul.addr %s417, 128
        %s419 = scalar_lea.vmem [#allocation10], %s418
        // Predicated region
        $region61: #{_forward_impl.1} parent=47 // pred_check
          %p420 = pneg %p208
        $region62: #{_forward_impl.1} parent=47 // pred_check_branch
          %422 = sbr.rel (%p420) target = $region64
        $region63: #{_forward_impl.1} parent=47 // pred_region
          %423 = dma.done %s416, 2048
        $region64: #{_forward_impl.1} parent=47 // pred_fallthru
          _
        %p424 = pneg %p68
        %p425 = pneg %p65
        %s426 = sand.u32 %s35, 1
        %s427 = scalar_lea.sflag [#allocation8], %s426
        %s428 = sand.u32 %s83, 1
        %s429 = smul.addr %s428, 16
        %s430 = scalar_lea.vmem [#allocation7], %s429
        %p431 = pneg %p96
        %p432 = pneg %p93
        %s433 = sld [smem:[#allocation3 + %s39]]
        %p434 = scmp.lt.s32.totalorder %s433, 1
        %s435 = scalar_select %p434, %s433, 1
        %s436 = scalar_lea.vmem %s3, %s435
        %p437 = pneg %p124
        %p438 = pneg %p121
        %s439 = sand.u32 %s35, 1
        %s440 = scalar_lea.sflag [#allocation8], %s439
        %s441 = sand.u32 %s139, 1
        %s442 = smul.addr %s441, 128
        %s443 = scalar_lea.vmem [#allocation9], %s442
        %p444 = pneg %p152
        %p445 = pneg %p149
        %s446 = sld [smem:[#allocation3 + %s39]]
        %p447 = scmp.lt.s32.totalorder %s446, 1
        %s448 = scalar_select %p447, %s446, 1
        %s449 = scalar_lea.vmem %s5, %s448
        %p450 = pneg %p180
        %p451 = pneg %p177
        %s452 = sand.u32 %s195, 1
        %s453 = scalar_lea.sflag [#allocation11], %s452
        %s454 = sand.u32 %s195, 1
        %s455 = smul.addr %s454, 128
        %s456 = scalar_lea.vmem [#allocation10], %s455
        %p457 = pneg %p208
        %p458 = pneg %p205
        %s459 = sld [smem:[#allocation3 + %s39]]
        %p460 = scmp.lt.s32.totalorder %s459, 1
        %s461 = scalar_select %p460, %s459, 1
        %s462 = scalar_lea.vmem %s7, %s461
        %p463 = pneg %p236
        %p464 = pneg %p233
        %p465 = pneg %p264
        %p466 = pneg %p261
        %s467 = sand.u32 %s251, 1
        %s468 = scalar_lea.sflag [#allocation6], %s467
        %s469 = sand.u32 %s251, 1
        %s470 = smul.addr %s469, 8
        %s471 = scalar_lea.vmem [#allocation12], %s470
        %s472 = sld [smem:[#allocation3 + %s39]]
        %s473 = sld [smem:[#allocation3 + %s39]]
        %p474 = scmp.lt.s32.totalorder %s473, 1
        %s475 = scalar_select %p474, %s473, 1
        %s476 = scalar_lea.vmem %s3, %s475
        %s477 = sld [smem:[#allocation3 + %s39]]
        %s478 = sld [smem:[#allocation3 + %s39]]
        %s479 = sld [smem:[#allocation3 + %s39]]
        %p480 = scmp.lt.s32.totalorder %s479, 1
        %s481 = scalar_select %p480, %s479, 1
        %s482 = scalar_lea.vmem %s5, %s481
        %s483 = sld [smem:[#allocation3 + %s39]]
        %s484 = sld [smem:[#allocation3 + %s39]]
        %s485 = sld [smem:[#allocation3 + %s39]]
        %p486 = scmp.lt.s32.totalorder %s485, 1
        %s487 = scalar_select %p486, %s485, 1
        %s488 = scalar_lea.vmem %s7, %s487
        %s489 = sld [smem:[#allocation3 + %s39]]
        %v490 = vld [vmem:[#allocation4] sm:$0xff]
        %v491 = vld [vmem:[%s401] sm:$0xff]
        %v492 = vld [vmem:[%s401 + $0x8] sm:$0xff]
        %v493 = vld [vmem:[%s476] sm:$0x1]
        %v495 = vlaneseq
        %v496 = vshrl.u32 %v495, 7
        %v497 = vsub.s32 0, %v496
        %v498 = vrot.slane %v493, %v497
        %vm500 = vcmask 130048
        %v502 = vsel %vm500, %v490, 0
        %504 = vmatprep.subr.mxu0 0.0
        %505 = vmatpush1.msra.mxu0 %v491
        %506 = vmatprep.subr.mxu0 0.0
        %507 = vmatpush1.msra.mxu0 %v492
        %508 = vmatprep.subr.mxu0 0.0
        %509 = vmatpush1.msra.mxu0 0.0
        %510 = vmatprep.subr.mxu0 0.0
        %511 = vmatpush1.msra.mxu0 0.0
        %512 = vmatprep.subr.mxu0 0.0
        %513 = vmatpush1.msra.mxu0 0.0
        %514 = vmatprep.subr.mxu0 0.0
        %515 = vmatpush1.msra.mxu0 0.0
        %516 = vmatprep.subr.mxu0 0.0
        %517 = vmatpush1.msra.mxu0 0.0
        %518 = vmatprep.subr.mxu0 0.0
        %519 = vmatpush1.msra.mxu0 0.0
        %520 = vmatprep.subr.mxu0 0.0
        %521 = vmatpush1.msra.mxu0 0.0
        %522 = vmatprep.subr.mxu0 0.0
        %523 = vmatpush1.msra.mxu0 0.0
        %524 = vmatprep.subr.mxu0 0.0
        %525 = vmatpush1.msra.mxu0 0.0
        %526 = vmatprep.subr.mxu0 0.0
        %527 = vmatpush1.msra.mxu0 0.0
        %528 = vmatprep.subr.mxu0 0.0
        %529 = vmatpush1.msra.mxu0 0.0
        %530 = vmatprep.subr.mxu0 0.0
        %531 = vmatpush1.msra.mxu0 0.0
        %532 = vmatprep.subr.mxu0 0.0
        %533 = vmatpush1.msra.mxu0 0.0
        %534 = vmatprep.subr.mxu0 0.0
        %535 = vmatpush1.msra.mxu0 0.0
        %536 = vmatprep.subr.mxu0 0.0
        %537 = vmatpush1.msra.mxu0 0.0
        %538 = vmatprep.subr.mxu0 0.0
        %539 = vmatpush1.msra.mxu0 0.0
        %540 = vmatprep.subr.mxu0 0.0
        %541 = vmatpush1.msra.mxu0 0.0
        %542 = vmatprep.subr.mxu0 0.0
        %543 = vmatpush1.msra.mxu0 0.0
        %544 = vmatprep.subr.mxu0 0.0
        %545 = vmatpush1.msra.mxu0 0.0
        %546 = vmatprep.subr.mxu0 0.0
        %547 = vmatpush1.msra.mxu0 0.0
        %548 = vmatprep.subr.mxu0 0.0
        %549 = vmatpush1.msra.mxu0 0.0
        %550 = vmatprep.subr.mxu0 0.0
        %551 = vmatpush1.msra.mxu0 0.0
        %552 = vmatprep.subr.mxu0 0.0
        %553 = vmatpush1.msra.mxu0 0.0
        %554 = vmatprep.subr.mxu0 0.0
        %555 = vmatpush1.msra.mxu0 0.0
        %556 = vmatprep.subr.mxu0 0.0
        %557 = vmatpush1.msra.mxu0 0.0
        %558 = vmatprep.subr.mxu0 0.0
        %559 = vmatpush1.msra.mxu0 0.0
        %560 = vmatprep.subr.mxu0 0.0
        %561 = vmatpush1.msra.mxu0 0.0
        %562 = vmatprep.subr.mxu0 0.0
        %563 = vmatpush1.msra.mxu0 0.0
        %564 = vmatprep.subr.mxu0 0.0
        %565 = vmatpush1.msra.mxu0 0.0
        %566 = vmatprep.subr.mxu0 0.0
        %567 = vmatpush1.msra.mxu0 0.0
        %568 = vmatprep.mubr.f32.mxu0 0.0
        %569 = vmatmul.mubr.f32.gmra.mrb[0].mxu0 %v502
        %v570 = vpop.f32.mrb[0].mxu0
        %v571 = vadd.f32 %v498, %v570
        %v572 = vpop.f32.mrb[0].mxu0
        %573 = vdwg.mxu0
        %v574 = vmax.f32 %v571, 0.0
        %v575 = vld [vmem:[%s410] sm:$0xff]
        %v576 = vld [vmem:[%s410 + $0x8] sm:$0xff]
        %v577 = vld [vmem:[%s410 + $0x10] sm:$0xff]
        %v578 = vld [vmem:[%s410 + $0x18] sm:$0xff]
        %v579 = vld [vmem:[%s410 + $0x20] sm:$0xff]
        %v580 = vld [vmem:[%s410 + $0x28] sm:$0xff]
        %v581 = vld [vmem:[%s410 + $0x30] sm:$0xff]
        %v582 = vld [vmem:[%s410 + $0x38] sm:$0xff]
        %v583 = vld [vmem:[%s410 + $0x40] sm:$0xff]
        %v584 = vld [vmem:[%s410 + $0x48] sm:$0xff]
        %v585 = vld [vmem:[%s410 + $0x50] sm:$0xff]
        %v586 = vld [vmem:[%s410 + $0x58] sm:$0xff]
        %v587 = vld [vmem:[%s410 + $0x60] sm:$0xff]
        %v588 = vld [vmem:[%s410 + $0x68] sm:$0xff]
        %v589 = vld [vmem:[%s410 + $0x70] sm:$0xff]
        %v590 = vld [vmem:[%s410 + $0x78] sm:$0xff]
        %v591 = vld [vmem:[%s482] sm:$0x1]
        %v593 = vlaneseq
        %v594 = vshrl.u32 %v593, 7
        %v595 = vsub.s32 0, %v594
        %v596 = vrot.slane %v591, %v595
        %598 = vmatprep.subr.mxu0 0.0
        %599 = vmatpush1.msra.mxu0 %v575
        %600 = vmatprep.subr.mxu0 0.0
        %601 = vmatpush1.msra.mxu0 %v576
        %602 = vmatprep.subr.mxu0 0.0
        %603 = vmatpush1.msra.mxu0 %v577
        %604 = vmatprep.subr.mxu0 0.0
        %605 = vmatpush1.msra.mxu0 %v578
        %606 = vmatprep.subr.mxu0 0.0
        %607 = vmatpush1.msra.mxu0 %v579
        %608 = vmatprep.subr.mxu0 0.0
        %609 = vmatpush1.msra.mxu0 %v580
        %610 = vmatprep.subr.mxu0 0.0
        %611 = vmatpush1.msra.mxu0 %v581
        %612 = vmatprep.subr.mxu0 0.0
        %613 = vmatpush1.msra.mxu0 %v582
        %614 = vmatprep.subr.mxu0 0.0
        %615 = vmatpush1.msra.mxu0 %v583
        %616 = vmatprep.subr.mxu0 0.0
        %617 = vmatpush1.msra.mxu0 %v584
        %618 = vmatprep.subr.mxu0 0.0
        %619 = vmatpush1.msra.mxu0 %v585
        %620 = vmatprep.subr.mxu0 0.0
        %621 = vmatpush1.msra.mxu0 %v586
        %622 = vmatprep.subr.mxu0 0.0
        %623 = vmatpush1.msra.mxu0 %v587
        %624 = vmatprep.subr.mxu0 0.0
        %625 = vmatpush1.msra.mxu0 %v588
        %626 = vmatprep.subr.mxu0 0.0
        %627 = vmatpush1.msra.mxu0 %v589
        %628 = vmatprep.subr.mxu0 0.0
        %629 = vmatpush1.msra.mxu0 %v590
        %630 = vmatprep.subr.mxu0 0.0
        %631 = vmatpush1.msra.mxu0 0.0
        %632 = vmatprep.subr.mxu0 0.0
        %633 = vmatpush1.msra.mxu0 0.0
        %634 = vmatprep.subr.mxu0 0.0
        %635 = vmatpush1.msra.mxu0 0.0
        %636 = vmatprep.subr.mxu0 0.0
        %637 = vmatpush1.msra.mxu0 0.0
        %638 = vmatprep.subr.mxu0 0.0
        %639 = vmatpush1.msra.mxu0 0.0
        %640 = vmatprep.subr.mxu0 0.0
        %641 = vmatpush1.msra.mxu0 0.0
        %642 = vmatprep.subr.mxu0 0.0
        %643 = vmatpush1.msra.mxu0 0.0
        %644 = vmatprep.subr.mxu0 0.0
        %645 = vmatpush1.msra.mxu0 0.0
        %646 = vmatprep.subr.mxu0 0.0
        %647 = vmatpush1.msra.mxu0 0.0
        %648 = vmatprep.subr.mxu0 0.0
        %649 = vmatpush1.msra.mxu0 0.0
        %650 = vmatprep.subr.mxu0 0.0
        %651 = vmatpush1.msra.mxu0 0.0
        %652 = vmatprep.subr.mxu0 0.0
        %653 = vmatpush1.msra.mxu0 0.0
        %654 = vmatprep.subr.mxu0 0.0
        %655 = vmatpush1.msra.mxu0 0.0
        %656 = vmatprep.subr.mxu0 0.0
        %657 = vmatpush1.msra.mxu0 0.0
        %658 = vmatprep.subr.mxu0 0.0
        %659 = vmatpush1.msra.mxu0 0.0
        %660 = vmatprep.subr.mxu0 0.0
        %661 = vmatpush1.msra.mxu0 0.0
        %662 = vmatprep.mubr.f32.mxu0 0.0
        %663 = vmatmul.mubr.f32.gmra.mrb[0].mxu0 %v574
        %v664 = vpop.f32.mrb[0].mxu0
        %v665 = vadd.f32 %v596, %v664
        %v666 = vpop.f32.mrb[0].mxu0
        %667 = vdwg.mxu0
        %v668 = vmax.f32 %v665, 0.0
        %v669 = vld [vmem:[%s419] sm:$0xff]
        %v670 = vld [vmem:[%s419 + $0x8] sm:$0xff]
        %v671 = vld [vmem:[%s419 + $0x10] sm:$0xff]
        %v672 = vld [vmem:[%s419 + $0x18] sm:$0xff]
        %v673 = vld [vmem:[%s419 + $0x20] sm:$0xff]
        %v674 = vld [vmem:[%s419 + $0x28] sm:$0xff]
        %v675 = vld [vmem:[%s419 + $0x30] sm:$0xff]
        %v676 = vld [vmem:[%s419 + $0x38] sm:$0xff]
        %v677 = vld [vmem:[%s419 + $0x40] sm:$0xff]
        %v678 = vld [vmem:[%s419 + $0x48] sm:$0xff]
        %v679 = vld [vmem:[%s419 + $0x50] sm:$0xff]
        %v680 = vld [vmem:[%s419 + $0x58] sm:$0xff]
        %v681 = vld [vmem:[%s419 + $0x60] sm:$0xff]
        %v682 = vld [vmem:[%s419 + $0x68] sm:$0xff]
        %v683 = vld [vmem:[%s419 + $0x70] sm:$0xff]
        %v684 = vld [vmem:[%s419 + $0x78] sm:$0xff]
        %v685 = vld [vmem:[%s488] sm:$0x1]
        %v687 = vlaneseq
        %v688 = vshrl.u32 %v687, 7
        %v689 = vsub.s32 0, %v688
        %v690 = vrot.slane %v685, %v689
        %692 = vmatprep.subr.mxu0 0.0
        %693 = vmatpush1.msra.mxu0 %v669
        %694 = vmatprep.subr.mxu0 0.0
        %695 = vmatpush1.msra.mxu0 %v670
        %696 = vmatprep.subr.mxu0 0.0
        %697 = vmatpush1.msra.mxu0 %v671
        %698 = vmatprep.subr.mxu0 0.0
        %699 = vmatpush1.msra.mxu0 %v672
        %700 = vmatprep.subr.mxu0 0.0
        %701 = vmatpush1.msra.mxu0 %v673
        %702 = vmatprep.subr.mxu0 0.0
        %703 = vmatpush1.msra.mxu0 %v674
        %704 = vmatprep.subr.mxu0 0.0
        %705 = vmatpush1.msra.mxu0 %v675
        %706 = vmatprep.subr.mxu0 0.0
        %707 = vmatpush1.msra.mxu0 %v676
        %708 = vmatprep.subr.mxu0 0.0
        %709 = vmatpush1.msra.mxu0 %v677
        %710 = vmatprep.subr.mxu0 0.0
        %711 = vmatpush1.msra.mxu0 %v678
        %712 = vmatprep.subr.mxu0 0.0
        %713 = vmatpush1.msra.mxu0 %v679
        %714 = vmatprep.subr.mxu0 0.0
        %715 = vmatpush1.msra.mxu0 %v680
        %716 = vmatprep.subr.mxu0 0.0
        %717 = vmatpush1.msra.mxu0 %v681
        %718 = vmatprep.subr.mxu0 0.0
        %719 = vmatpush1.msra.mxu0 %v682
        %720 = vmatprep.subr.mxu0 0.0
        %721 = vmatpush1.msra.mxu0 %v683
        %722 = vmatprep.subr.mxu0 0.0
        %723 = vmatpush1.msra.mxu0 %v684
        %724 = vmatprep.subr.mxu0 0.0
        %725 = vmatpush1.msra.mxu0 0.0
        %726 = vmatprep.subr.mxu0 0.0
        %727 = vmatpush1.msra.mxu0 0.0
        %728 = vmatprep.subr.mxu0 0.0
        %729 = vmatpush1.msra.mxu0 0.0
        %730 = vmatprep.subr.mxu0 0.0
        %731 = vmatpush1.msra.mxu0 0.0
        %732 = vmatprep.subr.mxu0 0.0
        %733 = vmatpush1.msra.mxu0 0.0
        %734 = vmatprep.subr.mxu0 0.0
        %735 = vmatpush1.msra.mxu0 0.0
        %736 = vmatprep.subr.mxu0 0.0
        %737 = vmatpush1.msra.mxu0 0.0
        %738 = vmatprep.subr.mxu0 0.0
        %739 = vmatpush1.msra.mxu0 0.0
        %740 = vmatprep.subr.mxu0 0.0
        %741 = vmatpush1.msra.mxu0 0.0
        %742 = vmatprep.subr.mxu0 0.0
        %743 = vmatpush1.msra.mxu0 0.0
        %744 = vmatprep.subr.mxu0 0.0
        %745 = vmatpush1.msra.mxu0 0.0
        %746 = vmatprep.subr.mxu0 0.0
        %747 = vmatpush1.msra.mxu0 0.0
        %748 = vmatprep.subr.mxu0 0.0
        %749 = vmatpush1.msra.mxu0 0.0
        %750 = vmatprep.subr.mxu0 0.0
        %751 = vmatpush1.msra.mxu0 0.0
        %752 = vmatprep.subr.mxu0 0.0
        %753 = vmatpush1.msra.mxu0 0.0
        %754 = vmatprep.subr.mxu0 0.0
        %755 = vmatpush1.msra.mxu0 0.0
        %756 = vmatprep.mubr.f32.mxu0 0.0
        %757 = vmatmul.mubr.f32.gmra.mrb[0].mxu0 %v668
        %v758 = vpop.f32.mrb[0].mxu0
        %v759 = vadd.f32 %v690, %v758
        %v760 = vpop.f32.mrb[0].mxu0
        %761 = vdwg.mxu0
        %v762 = vtanh.pop %v759
        %763 = vst [vmem:[%s471] sm:$0xff] %v762
        %s764 = sand.u32 %s251, 1
        %s765 = scalar_lea.sflag [#allocation6], %s764
        %s766 = sand.u32 %s251, 1
        %s767 = smul.addr %s766, 8
        %s768 = scalar_lea.vmem [#allocation12], %s767
        // Predicated region
        $region65: #{_forward_impl.1} parent=47 // pred_check
          %p769 = pneg %p261
        $region66: #{_forward_impl.1} parent=47 // pred_check_branch
          %771 = sbr.rel (%p769) target = $region68
        $region67: #{_forward_impl.1} parent=47 // pred_region
          %s773 = ssub.s32 128, 128
          %774 = vsyncadd %s765, %s773
          %s775 = sadd.s32 %s40, %s39
          %s776 = smul.addr %s775, 128
          %s777 = scalar_lea.hbm %s8, %s776
          %s779 = sshll.u32 %s768, 4
          %s780 = int_to_ptr.vmem [resolvable:$true] %s779
          %782 = dma.vmem_to_hbm [thread:$0]  %s780, 128, %s777, %s765
        $region68: #{_forward_impl.1} parent=47 // pred_fallthru
          _
      $region48: #{_forward_impl.1} parent=5 // pred_fallthru
        _
      %p783 = scmp.le.s32.totalorder 2, %s30
      // Predicated region
      $region69: #{_forward_impl.1} parent=5 // pred_check
        %p784 = pneg %p783
      $region70: #{_forward_impl.1} parent=5 // pred_check_branch
        %786 = sbr.rel (%p784) target = $region72
      $region71: #{_forward_impl.1} parent=5 // pred_region
        %s787 = ssub.s32 %s30, 2
        // Predicated region
        $region73: #{_forward_impl.1} parent=71 // pred_check
          %p788 = pneg %p267
        $region74: #{_forward_impl.1} parent=71 // pred_check_branch
          %790 = sbr.rel (%p788) target = $region76
        $region75: #{_forward_impl.1} parent=71 // pred_region
          %s791 = sand.u32 %s252, 1
          %s792 = scalar_lea.sflag [#allocation6], %s791
          %s793 = sand.u32 %s252, 1
          %s794 = smul.addr %s793, 8
          %s795 = scalar_lea.vmem [#allocation12], %s794
          %796 = dma.done %s792, 128
        $region76: #{_forward_impl.1} parent=71 // pred_fallthru
          _
      $region72: #{_forward_impl.1} parent=5 // pred_fallthru
        _
    $region6: #{_forward_impl.1} parent=1 // loop_footer
      %s34 = sadd.s32 1, %s30
    $region7: #{_forward_impl.1} parent=1 // loop_footer_branch
      %29 = sbr.rel target = $region3
    $region8: #{_forward_impl.1} parent=1 // loop_exit
      _
    %797 = vsyncpa [#allocation5], 1
    %s798 = scalar_lea.sflag [#allocation5], 1
    %799 = vsyncpa %s798, 1
    %800 = vsyncpa [#allocation8], 1
    %s801 = scalar_lea.sflag [#allocation8], 1
    %802 = vsyncpa %s801, 1
    %803 = vsyncpa [#allocation11], 1
    %s804 = scalar_lea.sflag [#allocation11], 1
    %805 = vsyncpa %s804, 1
    %806 = vsyncpa [#allocation6], 1
    %s807 = scalar_lea.sflag [#allocation6], 1
    %808 = vsyncpa %s807, 1

</llo_original>
